<compile_context>
chip_gen: v6e
topology: v6e:2x2x1
jax: 0.10.0
libtpu: 0.0.40
codegen_flags: <defaults>
</compile_context>

<pallas_src>
import functools
import math

import jax
import jax.numpy as jnp
from jax import lax
from jax.experimental import pallas as pl
from jax.experimental.pallas import tpu as pltpu


# ----------------------------------------------------------------------------
# Fully fused OT-resampling kernel:
#   cost build + Sinkhorn loop + final potentials + transport build + apply
# ----------------------------------------------------------------------------

def _ot_kernel(xs_ref, logw_ref, eps0_ref, x_ref,            # inputs
               out_ref,                                       # output (B,N,D)
               c_ref, a_ref, b_ref, eps_ref,                  # VMEM scratch
               *, eps_target, scaling, threshold, max_iter, log_n):
    B = xs_ref.shape[0]
    f32 = jnp.float32

    # ---- per-batch symmetric cost matrix C[b] = 0.5*||x_i - x_j||^2, built
    #      once directly in VMEM (B is small/static -> python loop unrolls) ----
    for b in range(B):
        xb = xs_ref[b].astype(f32)                                  # (N, D)
        sq = jnp.sum(xb * xb, axis=-1, keepdims=True)               # (N, 1)
        gram = lax.dot_general(xb, xb,
                               dimension_numbers=(((1,), (1,)), ((), ())),
                               preferred_element_type=f32)          # (N, N)
        c_ref[b] = 0.5 * jnp.maximum(sq + jnp.transpose(sq) - 2.0 * gram, 0.0)

    cm = c_ref[...]                            # (B, N, N)  symmetric per batch
    la = logw_ref[...].astype(f32)             # (B, 1, N)  log_alpha ("row")
    scaling_factor = scaling * scaling

    # softmins taking the pre-scaled cost cinv = C/eps (computed once, shared):
    #   row-form f (B,1,N), reduce over lanes j   -> "col" result (B,N,1)
    #   col-form f (B,N,1), reduce over sublanes i -> "row" result (B,1,N)
    # C is symmetric, so both match the reference softmin exactly without any
    # transposes.
    def softmin_row(f_row, eps_b, cinv):
        t = f_row - cinv                                            # (B, N, N)
        m = jnp.max(t, axis=2, keepdims=True)
        lse = m + jnp.log(jnp.sum(jnp.exp(t - m), axis=2, keepdims=True))
        return -eps_b * lse                                         # (B, N, 1)

    def softmin_col(f_col, eps_b, cinv):
        t = f_col - cinv                                            # (B, N, N)
        m = jnp.max(t, axis=1, keepdims=True)
        lse = m + jnp.log(jnp.sum(jnp.exp(t - m), axis=1, keepdims=True))
        return -eps_b * lse                                         # (B, 1, N)

    # ---- warm start (a_x / b_y of the reference are dead for forward) ----
    eps0 = eps0_ref[...].astype(f32)           # (B, 1, 1)  epsilon_0 per batch
    inv0 = 1.0 / eps0
    cinv0 = cm * inv0
    a_ref[...] = softmin_row(la, eps0, cinv0)            # a_y   (B, N, 1)
    b_ref[...] = softmin_col(-log_n, eps0, cinv0)        # b_x   (B, 1, N)
    eps_ref[...] = eps0

    # ---- symmetric Sinkhorn updates with eps annealing ----
    def body(i):
        run_eps = eps_ref[...]                           # (B, 1, 1)
        inv = 1.0 / run_eps
        cinv = cm * inv                                  # hoisted, shared
        a_y = a_ref[...]                                 # (B, N, 1)
        b_x = b_ref[...]                                 # (B, 1, N)
        # The reference's per-batch `continue_` masks are always all-True while
        # the loop runs (it exits as soon as any batch stops), so the
        # torch.where masking is a no-op and is dropped here.
        at_y = softmin_row(la + b_x * inv, run_eps, cinv)           # (B, N, 1)
        bt_x = softmin_col(a_y * inv - log_n, run_eps, cinv)        # (B, 1, N)
        a_new = 0.5 * (a_y + at_y)
        b_new = 0.5 * (b_x + bt_x)
        a_ref[...] = a_new
        b_ref[...] = b_new

        a_diff = jnp.max(jnp.abs(a_new - a_y), axis=1, keepdims=True)  # (B,1,1)
        b_diff = jnp.max(jnp.abs(b_new - b_x), axis=2, keepdims=True)  # (B,1,1)
        local_cont = jnp.logical_or(a_diff > threshold, b_diff > threshold)
        new_eps = jnp.maximum(run_eps * scaling_factor, eps_target)
        global_cont = jnp.logical_or(new_eps < run_eps, local_cont)    # (B,1,1)
        eps_ref[...] = new_eps

        # Global stop: continue only while ALL batches continue
        # (mirrors torch.all(continue_) in the reference).
        all_cont = jnp.min(jnp.where(global_cont, 1.0, 0.0)) > 0.5
        return jnp.where(all_cont, i + 1, jnp.int32(max_iter))

    lax.while_loop(lambda i: i < max_iter - 1, body, jnp.int32(0))

    # ---- final potentials at eps_target (f32; torch uses f64 internally) ----
    inv_t = 1.0 / eps_target
    cinv_t = cm * inv_t
    a_y = a_ref[...]
    b_x = b_ref[...]
    alpha = softmin_row(la + b_x * inv_t, eps_target, cinv_t)       # (B, N, 1)
    beta = softmin_col(a_y * inv_t - log_n, eps_target, cinv_t)     # (B, 1, N)

    # ---- transport matrix + apply, fused (T never leaves VMEM) ----
    # temp = (f_i + g_j - C_ij)/eps ; normalize over i ; + log_n + logw_j
    temp = (alpha + beta) * inv_t - cinv_t                          # (B, N, N)
    m = jnp.max(temp, axis=1, keepdims=True)
    lse = m + jnp.log(jnp.sum(jnp.exp(temp - m), axis=1, keepdims=True))
    tmat = jnp.exp(temp - lse + log_n + la)                         # (B, N, N)

    for b in range(B):
        # Matmul uses the ORIGINAL (unscaled) particles.
        out_ref[b] = jnp.dot(tmat[b], x_ref[b].astype(f32),
                             preferred_element_type=f32)            # (N, D)


def ot_transport_apply(scaled_x, particles, logw_row, eps0, *, eps, scaling,
                       threshold, max_iter, log_n):
    """Runs the fused Sinkhorn + transport-apply kernel. Returns (B,N,D)."""
    B, N, D = particles.shape
    kern = functools.partial(
        _ot_kernel,
        eps_target=float(eps), scaling=float(scaling),
        threshold=float(threshold), max_iter=int(max_iter), log_n=float(log_n))
    vmem_spec = functools.partial(pl.BlockSpec,
                                  memory_space=pltpu.MemorySpace.VMEM)
    # Scoped-VMEM budget: cost scratch + a few (B,N,N) softmin temporaries +
    # IO buffers + headroom; capped at 64 MiB so it is legal on v7x too.
    cost_bytes = B * N * N * 4
    io_bytes = 4 * B * N * max(D, 128) * 4
    vmem_limit = int(min(max(4 * cost_bytes + io_bytes + (4 << 20), 32 << 20),
                         64 << 20))
    return pl.pallas_call(
        kern,
        in_specs=[vmem_spec(), vmem_spec(), vmem_spec(), vmem_spec()],
        out_specs=vmem_spec(),
        out_shape=jax.ShapeDtypeStruct((B, N, D), jnp.float32),
        scratch_shapes=[pltpu.VMEM((B, N, N), jnp.float32),   # cost matrices
                        pltpu.VMEM((B, N, 1), jnp.float32),   # a_y potential
                        pltpu.VMEM((B, 1, N), jnp.float32),   # b_x potential
                        pltpu.VMEM((B, 1, 1), jnp.float32)],  # running epsilon
        compiler_params=pltpu.CompilerParams(vmem_limit_bytes=vmem_limit),
    )(scaled_x.astype(jnp.float32),
      logw_row.astype(jnp.float32),
      eps0.reshape(B, 1, 1).astype(jnp.float32),
      particles.astype(jnp.float32))


# ----------------------------------------------------------------------------
# Plain-JAX glue (tiny O(B*N*D) reductions)
# ----------------------------------------------------------------------------

def diameter(x, y):
    dx = jnp.max(jnp.std(x, axis=1), axis=-1)
    dy = jnp.max(jnp.std(y, axis=1), axis=-1)
    res = jnp.maximum(dx, dy)
    return jnp.where(res == 0.0, 1.0, res)   # torch returns f64; f32 on TPU


def max_min(x, y):
    # Faithful to the (asymmetric) reference implementation.
    max_max = jnp.maximum(jnp.max(jnp.max(x, axis=1), axis=1),
                          jnp.max(jnp.max(y, axis=1), axis=1))
    min_min = jnp.minimum(jnp.min(jnp.max(x, axis=1), axis=1),
                          jnp.min(jnp.min(y, axis=1), axis=1))
    return max_max - min_min


def resampler_ot(particles, weights, *, eps=0.1, scaling=0.75,
                 threshold=1e-3, max_iter=100):
    x = particles.astype(jnp.float32)
    w = weights.astype(jnp.float32)
    B, N, D = x.shape
    logw = jnp.log(w)
    log_n = math.log(float(N))

    # ---- transport_function prologue ----
    centered_x = x - jnp.mean(x, axis=1, keepdims=True)
    diam = diameter(x, x)                                            # (B,)
    scale = diam[:, None, None] * jnp.sqrt(jnp.float32(D))
    scaled_x = centered_x / scale

    mm = max_min(scaled_x, scaled_x)                                 # (B,)
    eps0 = mm * mm                                                   # epsilon_0

    # ---- single fused kernel: Sinkhorn + transport build + T @ particles ----
    transported = ot_transport_apply(
        scaled_x, x, logw.reshape(B, 1, N), eps0,
        eps=eps, scaling=scaling, threshold=threshold,
        max_iter=max_iter, log_n=log_n)                              # (B, N, D)

    # apply_transport_matrix with flag == True (static in the reference call).
    resampled_particles = transported
    resampled_weights = jnp.full_like(w, 1.0 / N)
    return resampled_particles, resampled_weights


class Resampler:
    """Mirror of the PyTorch `resampler` nn.Module (forward only)."""

    def __init__(self, resampler_type="ot", epsilon=0.1, scaling=0.75,
                 threshold=1e-3, max_iter=100, alpha=0.5):
        if resampler_type != "ot":
            # TODO(synk): 'soft' resampler_type (stratified gather resampling)
            # not ported to Pallas; only the 'ot' Sinkhorn path is implemented.
            raise NotImplementedError("only resampler_type='ot' is implemented")
        self._fn = jax.jit(functools.partial(
            resampler_ot, eps=epsilon, scaling=scaling,
            threshold=threshold, max_iter=max_iter))

    def __call__(self, particles, particle_probs):
        return self._fn(particles, particle_probs)


if __name__ == "__main__":
    key = jax.random.PRNGKey(0)
    k1, k2 = jax.random.split(key)
    B, N, D = 2, 8, 4
    particles = jax.random.normal(k1, (B, N, D), dtype=jnp.float32)
    weights = jax.nn.softmax(jax.random.normal(k2, (B, N), dtype=jnp.float32),
                             axis=-1)

    model = Resampler(resampler_type="ot", epsilon=0.1, scaling=0.75,
                      threshold=1e-3, max_iter=100)
    particles_resampled, probs_resampled = model(particles, weights)
    jax.block_until_ready((particles_resampled, probs_resampled))

    assert particles_resampled.shape == (B, N, D)
    assert probs_resampled.shape == (B, N)
    assert bool(jnp.all(jnp.isfinite(particles_resampled)))
    assert bool(jnp.all(jnp.isfinite(probs_resampled)))
    print("KERNEL_OK")
</pallas_src>

<mosaic_0001>
module attributes {stable_mosaic.version = 11 : i64} {
  func.func @_ot_kernel(%arg0: memref<2x8x4xf32, #tpu.memory_space<vmem>>, %arg1: memref<2x1x8xf32, #tpu.memory_space<vmem>>, %arg2: memref<2x1x1xf32, #tpu.memory_space<vmem>>, %arg3: memref<2x8x4xf32, #tpu.memory_space<vmem>>, %arg4: memref<2x8x4xf32, #tpu.memory_space<vmem>>, %arg5: memref<2x8x8xf32, #tpu.memory_space<vmem>>, %arg6: memref<2x8x1xf32, #tpu.memory_space<vmem>>, %arg7: memref<2x1x8xf32, #tpu.memory_space<vmem>>, %arg8: memref<2x1x1xf32, #tpu.memory_space<vmem>>) attributes {dimension_semantics = [], scalar_prefetch = 0 : i64, scratch_operands = 4 : i64, tpu.core_type = #tpu.core_type<tc>} {
    %c0 = arith.constant 0 : index
    %c0_0 = arith.constant 0 : index
    %c0_1 = arith.constant 0 : index
    %0 = vector.load %arg0[%c0, %c0_0, %c0_1] : memref<2x8x4xf32, #tpu.memory_space<vmem>>, vector<1x8x4xf32>
    %1 = vector.shape_cast %0 : vector<1x8x4xf32> to vector<8x4xf32>
    %2 = arith.mulf %1, %1 : vector<8x4xf32>
    %cst = arith.constant dense<0.000000e+00> : vector<8xf32>
    %3 = vector.multi_reduction <add>, %2, %cst [1] : vector<8x4xf32> to vector<8xf32>
    %4 = vector.shape_cast %3 : vector<8xf32> to vector<8x1xf32>
    %cst_2 = arith.constant dense<0.000000e+00> : vector<8x8xf32>
    %5 = tpu.matmul %1, %1, %cst_2 {dimension_numbers = #tpu.dot_dimension_numbers<[1], [1], [0], [0], [0, 0, 1, 0], [], []>} : vector<8x4xf32>, vector<8x4xf32>, vector<8x8xf32> -> vector<8x8xf32>
    %6 = tpu.transpose %4, [1, 0] : vector<8x1xf32> -> vector<1x8xf32>
    %7 = vector.broadcast %4 : vector<8x1xf32> to vector<8x8xf32>
    %8 = vector.broadcast %6 : vector<1x8xf32> to vector<8x8xf32>
    %9 = arith.addf %7, %8 : vector<8x8xf32>
    %cst_3 = arith.constant 2.000000e+00 : f32
    %10 = vector.broadcast %cst_3 : f32 to vector<8x8xf32>
    %11 = arith.mulf %10, %5 : vector<8x8xf32>
    %12 = arith.subf %9, %11 : vector<8x8xf32>
    %cst_4 = arith.constant 0.000000e+00 : f32
    %13 = vector.broadcast %cst_4 : f32 to vector<8x8xf32>
    %14 = arith.maximumf %12, %13 : vector<8x8xf32>
    %cst_5 = arith.constant 5.000000e-01 : f32
    %15 = vector.broadcast %cst_5 : f32 to vector<8x8xf32>
    %16 = arith.mulf %15, %14 : vector<8x8xf32>
    %c0_6 = arith.constant 0 : index
    %c0_7 = arith.constant 0 : index
    %c0_8 = arith.constant 0 : index
    %17 = vector.load %arg5[%c0_6, %c0_7, %c0_8] : memref<2x8x8xf32, #tpu.memory_space<vmem>>, vector<1x8x8xf32>
    %18 = vector.shape_cast %17 : vector<1x8x8xf32> to vector<8x8xf32>
    %19 = vector.shape_cast %16 : vector<8x8xf32> to vector<1x8x8xf32>
    tpu.vector_store %arg5[%c0_6, %c0_7, %c0_8], %19 {strides = array<i32>} : memref<2x8x8xf32, #tpu.memory_space<vmem>>, vector<1x8x8xf32>,
    %c1 = arith.constant 1 : index
    %c0_9 = arith.constant 0 : index
    %c0_10 = arith.constant 0 : index
    %20 = vector.load %arg0[%c1, %c0_9, %c0_10] : memref<2x8x4xf32, #tpu.memory_space<vmem>>, vector<1x8x4xf32>
    %21 = vector.shape_cast %20 : vector<1x8x4xf32> to vector<8x4xf32>
    %22 = arith.mulf %21, %21 : vector<8x4xf32>
    %cst_11 = arith.constant dense<0.000000e+00> : vector<8xf32>
    %23 = vector.multi_reduction <add>, %22, %cst_11 [1] : vector<8x4xf32> to vector<8xf32>
    %24 = vector.shape_cast %23 : vector<8xf32> to vector<8x1xf32>
    %cst_12 = arith.constant dense<0.000000e+00> : vector<8x8xf32>
    %25 = tpu.matmul %21, %21, %cst_12 {dimension_numbers = #tpu.dot_dimension_numbers<[1], [1], [0], [0], [0, 0, 1, 0], [], []>} : vector<8x4xf32>, vector<8x4xf32>, vector<8x8xf32> -> vector<8x8xf32>
    %26 = tpu.transpose %24, [1, 0] : vector<8x1xf32> -> vector<1x8xf32>
    %27 = vector.broadcast %24 : vector<8x1xf32> to vector<8x8xf32>
    %28 = vector.broadcast %26 : vector<1x8xf32> to vector<8x8xf32>
    %29 = arith.addf %27, %28 : vector<8x8xf32>
    %cst_13 = arith.constant 2.000000e+00 : f32
    %30 = vector.broadcast %cst_13 : f32 to vector<8x8xf32>
    %31 = arith.mulf %30, %25 : vector<8x8xf32>
    %32 = arith.subf %29, %31 : vector<8x8xf32>
    %cst_14 = arith.constant 0.000000e+00 : f32
    %33 = vector.broadcast %cst_14 : f32 to vector<8x8xf32>
    %34 = arith.maximumf %32, %33 : vector<8x8xf32>
    %cst_15 = arith.constant 5.000000e-01 : f32
    %35 = vector.broadcast %cst_15 : f32 to vector<8x8xf32>
    %36 = arith.mulf %35, %34 : vector<8x8xf32>
    %c1_16 = arith.constant 1 : index
    %c0_17 = arith.constant 0 : index
    %c0_18 = arith.constant 0 : index
    %37 = vector.load %arg5[%c1_16, %c0_17, %c0_18] : memref<2x8x8xf32, #tpu.memory_space<vmem>>, vector<1x8x8xf32>
    %38 = vector.shape_cast %37 : vector<1x8x8xf32> to vector<8x8xf32>
    %39 = vector.shape_cast %36 : vector<8x8xf32> to vector<1x8x8xf32>
    tpu.vector_store %arg5[%c1_16, %c0_17, %c0_18], %39 {strides = array<i32>} : memref<2x8x8xf32, #tpu.memory_space<vmem>>, vector<1x8x8xf32>,
    %c0_19 = arith.constant 0 : index
    %c0_20 = arith.constant 0 : index
    %c0_21 = arith.constant 0 : index
    %40 = vector.load %arg5[%c0_19, %c0_20, %c0_21] : memref<2x8x8xf32, #tpu.memory_space<vmem>>, vector<2x8x8xf32>
    %c0_22 = arith.constant 0 : index
    %c0_23 = arith.constant 0 : index
    %c0_24 = arith.constant 0 : index
    %41 = vector.load %arg1[%c0_22, %c0_23, %c0_24] : memref<2x1x8xf32, #tpu.memory_space<vmem>>, vector<2x1x8xf32>
    %c0_25 = arith.constant 0 : index
    %c0_26 = arith.constant 0 : index
    %c0_27 = arith.constant 0 : index
    %42 = vector.load %arg2[%c0_25, %c0_26, %c0_27] : memref<2x1x1xf32, #tpu.memory_space<vmem>>, vector<2x1x1xf32>
    %cst_28 = arith.constant 1.000000e+00 : f32
    %43 = vector.broadcast %cst_28 : f32 to vector<2x1x1xf32>
    %44 = arith.divf %43, %42 : vector<2x1x1xf32>
    %45 = vector.broadcast %44 : vector<2x1x1xf32> to vector<2x8x8xf32>
    %46 = arith.mulf %40, %45 : vector<2x8x8xf32>
    %47 = vector.broadcast %41 : vector<2x1x8xf32> to vector<2x8x8xf32>
    %48 = arith.subf %47, %46 : vector<2x8x8xf32>
    %cst_29 = arith.constant dense<0xFF800000> : vector<2x8xf32>
    %49 = vector.multi_reduction <maximumf>, %48, %cst_29 [2] : vector<2x8x8xf32> to vector<2x8xf32>
    %50 = vector.shape_cast %49 : vector<2x8xf32> to vector<2x8x1xf32>
    %51 = vector.broadcast %50 : vector<2x8x1xf32> to vector<2x8x8xf32>
    %52 = arith.subf %48, %51 : vector<2x8x8xf32>
    %53 = math.exp %52 : vector<2x8x8xf32>
    %cst_30 = arith.constant dense<0.000000e+00> : vector<2x8xf32>
    %54 = vector.multi_reduction <add>, %53, %cst_30 [2] : vector<2x8x8xf32> to vector<2x8xf32>
    %55 = vector.shape_cast %54 : vector<2x8xf32> to vector<2x8x1xf32>
    %56 = math.log %55 : vector<2x8x1xf32>
    %57 = arith.addf %50, %56 : vector<2x8x1xf32>
    %cst_31 = arith.constant 0.000000e+00 : f32
    %58 = vector.broadcast %cst_31 : f32 to vector<2x1x1xf32>
    %59 = arith.subf %58, %42 : vector<2x1x1xf32>
    %60 = vector.broadcast %59 : vector<2x1x1xf32> to vector<2x8x1xf32>
    %61 = arith.mulf %60, %57 : vector<2x8x1xf32>
    %c0_32 = arith.constant 0 : index
    %c0_33 = arith.constant 0 : index
    %c0_34 = arith.constant 0 : index
    %62 = vector.load %arg6[%c0_32, %c0_33, %c0_34] : memref<2x8x1xf32, #tpu.memory_space<vmem>>, vector<2x8x1xf32>
    tpu.vector_store %arg6[%c0_32, %c0_33, %c0_34], %61 {strides = array<i32>} : memref<2x8x1xf32, #tpu.memory_space<vmem>>, vector<2x8x1xf32>,
    %cst_35 = arith.constant -2.07944155 : f32
    %63 = vector.broadcast %cst_35 : f32 to vector<2x8x8xf32>
    %64 = arith.subf %63, %46 : vector<2x8x8xf32>
    %cst_36 = arith.constant dense<0xFF800000> : vector<2x8xf32>
    %65 = vector.multi_reduction <maximumf>, %64, %cst_36 [1] : vector<2x8x8xf32> to vector<2x8xf32>
    %66 = vector.shape_cast %65 : vector<2x8xf32> to vector<2x1x8xf32>
    %67 = vector.broadcast %66 : vector<2x1x8xf32> to vector<2x8x8xf32>
    %68 = arith.subf %64, %67 : vector<2x8x8xf32>
    %69 = math.exp %68 : vector<2x8x8xf32>
    %cst_37 = arith.constant dense<0.000000e+00> : vector<2x8xf32>
    %70 = vector.multi_reduction <add>, %69, %cst_37 [1] : vector<2x8x8xf32> to vector<2x8xf32>
    %71 = vector.shape_cast %70 : vector<2x8xf32> to vector<2x1x8xf32>
    %72 = math.log %71 : vector<2x1x8xf32>
    %73 = arith.addf %66, %72 : vector<2x1x8xf32>
    %cst_38 = arith.constant 0.000000e+00 : f32
    %74 = vector.broadcast %cst_38 : f32 to vector<2x1x1xf32>
    %75 = arith.subf %74, %42 : vector<2x1x1xf32>
    %76 = vector.broadcast %75 : vector<2x1x1xf32> to vector<2x1x8xf32>
    %77 = arith.mulf %76, %73 : vector<2x1x8xf32>
    %c0_39 = arith.constant 0 : index
    %c0_40 = arith.constant 0 : index
    %c0_41 = arith.constant 0 : index
    %78 = vector.load %arg7[%c0_39, %c0_40, %c0_41] : memref<2x1x8xf32, #tpu.memory_space<vmem>>, vector<2x1x8xf32>
    tpu.vector_store %arg7[%c0_39, %c0_40, %c0_41], %77 {strides = array<i32>} : memref<2x1x8xf32, #tpu.memory_space<vmem>>, vector<2x1x8xf32>,
    %c0_42 = arith.constant 0 : index
    %c0_43 = arith.constant 0 : index
    %c0_44 = arith.constant 0 : index
    %79 = vector.load %arg8[%c0_42, %c0_43, %c0_44] : memref<2x1x1xf32, #tpu.memory_space<vmem>>, vector<2x1x1xf32>
    tpu.vector_store %arg8[%c0_42, %c0_43, %c0_44], %42 {strides = array<i32>} : memref<2x1x1xf32, #tpu.memory_space<vmem>>, vector<2x1x1xf32>,
    %c0_i32 = arith.constant 0 : i32
    %80 = scf.while (%arg9 = %c0_i32) : (i32) -> i32 {
      %c99_i32 = arith.constant 99 : i32
      %156 = arith.cmpi slt, %arg9, %c99_i32 : i32
      scf.condition(%156) %arg9 : i32
    } do {
    ^bb0(%arg9: i32):
      %c0_79 = arith.constant 0 : index
      %c0_80 = arith.constant 0 : index
      %c0_81 = arith.constant 0 : index
      %156 = vector.load %arg8[%c0_79, %c0_80, %c0_81] : memref<2x1x1xf32, #tpu.memory_space<vmem>>, vector<2x1x1xf32>
      %cst_82 = arith.constant 1.000000e+00 : f32
      %157 = vector.broadcast %cst_82 : f32 to vector<2x1x1xf32>
      %158 = arith.divf %157, %156 : vector<2x1x1xf32>
      %159 = vector.broadcast %158 : vector<2x1x1xf32> to vector<2x8x8xf32>
      %160 = arith.mulf %40, %159 : vector<2x8x8xf32>
      %c0_83 = arith.constant 0 : index
      %c0_84 = arith.constant 0 : index
      %c0_85 = arith.constant 0 : index
      %161 = vector.load %arg6[%c0_83, %c0_84, %c0_85] : memref<2x8x1xf32, #tpu.memory_space<vmem>>, vector<2x8x1xf32>
      %c0_86 = arith.constant 0 : index
      %c0_87 = arith.constant 0 : index
      %c0_88 = arith.constant 0 : index
      %162 = vector.load %arg7[%c0_86, %c0_87, %c0_88] : memref<2x1x8xf32, #tpu.memory_space<vmem>>, vector<2x1x8xf32>
      %163 = vector.broadcast %158 : vector<2x1x1xf32> to vector<2x1x8xf32>
      %164 = arith.mulf %162, %163 : vector<2x1x8xf32>
      %165 = arith.addf %41, %164 : vector<2x1x8xf32>
      %166 = vector.broadcast %165 : vector<2x1x8xf32> to vector<2x8x8xf32>
      %167 = arith.subf %166, %160 : vector<2x8x8xf32>
      %cst_89 = arith.constant dense<0xFF800000> : vector<2x8xf32>
      %168 = vector.multi_reduction <maximumf>, %167, %cst_89 [2] : vector<2x8x8xf32> to vector<2x8xf32>
      %169 = vector.shape_cast %168 : vector<2x8xf32> to vector<2x8x1xf32>
      %170 = vector.broadcast %169 : vector<2x8x1xf32> to vector<2x8x8xf32>
      %171 = arith.subf %167, %170 : vector<2x8x8xf32>
      %172 = math.exp %171 : vector<2x8x8xf32>
      %cst_90 = arith.constant dense<0.000000e+00> : vector<2x8xf32>
      %173 = vector.multi_reduction <add>, %172, %cst_90 [2] : vector<2x8x8xf32> to vector<2x8xf32>
      %174 = vector.shape_cast %173 : vector<2x8xf32> to vector<2x8x1xf32>
      %175 = math.log %174 : vector<2x8x1xf32>
      %176 = arith.addf %169, %175 : vector<2x8x1xf32>
      %cst_91 = arith.constant 0.000000e+00 : f32
      %177 = vector.broadcast %cst_91 : f32 to vector<2x1x1xf32>
      %178 = arith.subf %177, %156 : vector<2x1x1xf32>
      %179 = vector.broadcast %178 : vector<2x1x1xf32> to vector<2x8x1xf32>
      %180 = arith.mulf %179, %176 : vector<2x8x1xf32>
      %181 = vector.broadcast %158 : vector<2x1x1xf32> to vector<2x8x1xf32>
      %182 = arith.mulf %161, %181 : vector<2x8x1xf32>
      %cst_92 = arith.constant 2.07944155 : f32
      %183 = vector.broadcast %cst_92 : f32 to vector<2x8x1xf32>
      %184 = arith.subf %182, %183 : vector<2x8x1xf32>
      %185 = vector.broadcast %184 : vector<2x8x1xf32> to vector<2x8x8xf32>
      %186 = arith.subf %185, %160 : vector<2x8x8xf32>
      %cst_93 = arith.constant dense<0xFF800000> : vector<2x8xf32>
      %187 = vector.multi_reduction <maximumf>, %186, %cst_93 [1] : vector<2x8x8xf32> to vector<2x8xf32>
      %188 = vector.shape_cast %187 : vector<2x8xf32> to vector<2x1x8xf32>
      %189 = vector.broadcast %188 : vector<2x1x8xf32> to vector<2x8x8xf32>
      %190 = arith.subf %186, %189 : vector<2x8x8xf32>
      %191 = math.exp %190 : vector<2x8x8xf32>
      %cst_94 = arith.constant dense<0.000000e+00> : vector<2x8xf32>
      %192 = vector.multi_reduction <add>, %191, %cst_94 [1] : vector<2x8x8xf32> to vector<2x8xf32>
      %193 = vector.shape_cast %192 : vector<2x8xf32> to vector<2x1x8xf32>
      %194 = math.log %193 : vector<2x1x8xf32>
      %195 = arith.addf %188, %194 : vector<2x1x8xf32>
      %cst_95 = arith.constant 0.000000e+00 : f32
      %196 = vector.broadcast %cst_95 : f32 to vector<2x1x1xf32>
      %197 = arith.subf %196, %156 : vector<2x1x1xf32>
      %198 = vector.broadcast %197 : vector<2x1x1xf32> to vector<2x1x8xf32>
      %199 = arith.mulf %198, %195 : vector<2x1x8xf32>
      %200 = arith.addf %161, %180 : vector<2x8x1xf32>
      %cst_96 = arith.constant 5.000000e-01 : f32
      %201 = vector.broadcast %cst_96 : f32 to vector<2x8x1xf32>
      %202 = arith.mulf %201, %200 : vector<2x8x1xf32>
      %203 = arith.addf %162, %199 : vector<2x1x8xf32>
      %cst_97 = arith.constant 5.000000e-01 : f32
      %204 = vector.broadcast %cst_97 : f32 to vector<2x1x8xf32>
      %205 = arith.mulf %204, %203 : vector<2x1x8xf32>
      %c0_98 = arith.constant 0 : index
      %c0_99 = arith.constant 0 : index
      %c0_100 = arith.constant 0 : index
      %206 = vector.load %arg6[%c0_98, %c0_99, %c0_100] : memref<2x8x1xf32, #tpu.memory_space<vmem>>, vector<2x8x1xf32>
      tpu.vector_store %arg6[%c0_98, %c0_99, %c0_100], %202 {strides = array<i32>} : memref<2x8x1xf32, #tpu.memory_space<vmem>>, vector<2x8x1xf32>,
      %c0_101 = arith.constant 0 : index
      %c0_102 = arith.constant 0 : index
      %c0_103 = arith.constant 0 : index
      %207 = vector.load %arg7[%c0_101, %c0_102, %c0_103] : memref<2x1x8xf32, #tpu.memory_space<vmem>>, vector<2x1x8xf32>
      tpu.vector_store %arg7[%c0_101, %c0_102, %c0_103], %205 {strides = array<i32>} : memref<2x1x8xf32, #tpu.memory_space<vmem>>, vector<2x1x8xf32>,
      %208 = arith.subf %202, %161 : vector<2x8x1xf32>
      %209 = math.absf %208 : vector<2x8x1xf32>
      %cst_104 = arith.constant dense<0xFF800000> : vector<2x1xf32>
      %210 = vector.multi_reduction <maximumf>, %209, %cst_104 [1] : vector<2x8x1xf32> to vector<2x1xf32>
      %211 = vector.shape_cast %210 : vector<2x1xf32> to vector<2x1x1xf32>
      %212 = arith.subf %205, %162 : vector<2x1x8xf32>
      %213 = math.absf %212 : vector<2x1x8xf32>
      %cst_105 = arith.constant dense<0xFF800000> : vector<2x1xf32>
      %214 = vector.multi_reduction <maximumf>, %213, %cst_105 [2] : vector<2x1x8xf32> to vector<2x1xf32>
      %215 = vector.shape_cast %214 : vector<2x1xf32> to vector<2x1x1xf32>
      %cst_106 = arith.constant 1.000000e-03 : f32
      %216 = vector.broadcast %cst_106 : f32 to vector<2x1x1xf32>
      %217 = arith.cmpf ogt, %211, %216 : vector<2x1x1xf32>
      %cst_107 = arith.constant 1.000000e-03 : f32
      %218 = vector.broadcast %cst_107 : f32 to vector<2x1x1xf32>
      %219 = arith.cmpf ogt, %215, %218 : vector<2x1x1xf32>
      %220 = arith.ori %217, %219 : vector<2x1x1xi1>
      %cst_108 = arith.constant 5.625000e-01 : f32
      %221 = vector.broadcast %cst_108 : f32 to vector<2x1x1xf32>
      %222 = arith.mulf %156, %221 : vector<2x1x1xf32>
      %cst_109 = arith.constant 1.000000e-01 : f32
      %223 = vector.broadcast %cst_109 : f32 to vector<2x1x1xf32>
      %224 = arith.maximumf %222, %223 : vector<2x1x1xf32>
      %225 = arith.cmpf olt, %224, %156 : vector<2x1x1xf32>
      %226 = arith.ori %225, %220 : vector<2x1x1xi1>
      %c0_110 = arith.constant 0 : index
      %c0_111 = arith.constant 0 : index
      %c0_112 = arith.constant 0 : index
      %227 = vector.load %arg8[%c0_110, %c0_111, %c0_112] : memref<2x1x1xf32, #tpu.memory_space<vmem>>, vector<2x1x1xf32>
      tpu.vector_store %arg8[%c0_110, %c0_111, %c0_112], %224 {strides = array<i32>} : memref<2x1x1xf32, #tpu.memory_space<vmem>>, vector<2x1x1xf32>,
      %cst_113 = arith.constant 1.000000e+00 : f32
      %cst_114 = arith.constant 0.000000e+00 : f32
      %228 = vector.broadcast %cst_113 : f32 to vector<2x1x1xf32>
      %229 = vector.broadcast %cst_114 : f32 to vector<2x1x1xf32>
      %230 = arith.select %226, %228, %229 : vector<2x1x1xi1>, vector<2x1x1xf32>
      %231 = vector.shape_cast %230 : vector<2x1x1xf32> to vector<1x2x1x1xf32>
      %cst_115 = arith.constant dense<0x7F800000> : vector<1xf32>
      %232 = vector.multi_reduction <minimumf>, %231, %cst_115 [1, 2, 3] : vector<1x2x1x1xf32> to vector<1xf32>
      %233 = vector.shape_cast %232 : vector<1xf32> to vector<1x1x1x1xf32>
      %234 = vector.extract %233[0, 0, 0, 0] : f32 from vector<1x1x1x1xf32>
      %cst_116 = arith.constant 5.000000e-01 : f32
      %235 = arith.cmpf ogt, %234, %cst_116 : f32
      %c1_i32 = arith.constant 1 : i32
      %236 = arith.addi %arg9, %c1_i32 : i32
      %c100_i32 = arith.constant 100 : i32
      %237 = arith.select %235, %236, %c100_i32 : i32
      scf.yield %237 : i32
    }
    %cst_45 = arith.constant 1.000000e+01 : f32
    %81 = vector.broadcast %cst_45 : f32 to vector<2x8x8xf32>
    %82 = arith.mulf %40, %81 : vector<2x8x8xf32>
    %c0_46 = arith.constant 0 : index
    %c0_47 = arith.constant 0 : index
    %c0_48 = arith.constant 0 : index
    %83 = vector.load %arg6[%c0_46, %c0_47, %c0_48] : memref<2x8x1xf32, #tpu.memory_space<vmem>>, vector<2x8x1xf32>
    %c0_49 = arith.constant 0 : index
    %c0_50 = arith.constant 0 : index
    %c0_51 = arith.constant 0 : index
    %84 = vector.load %arg7[%c0_49, %c0_50, %c0_51] : memref<2x1x8xf32, #tpu.memory_space<vmem>>, vector<2x1x8xf32>
    %cst_52 = arith.constant 1.000000e+01 : f32
    %85 = vector.broadcast %cst_52 : f32 to vector<2x1x8xf32>
    %86 = arith.mulf %84, %85 : vector<2x1x8xf32>
    %87 = arith.addf %41, %86 : vector<2x1x8xf32>
    %88 = vector.broadcast %87 : vector<2x1x8xf32> to vector<2x8x8xf32>
    %89 = arith.subf %88, %82 : vector<2x8x8xf32>
    %cst_53 = arith.constant dense<0xFF800000> : vector<2x8xf32>
    %90 = vector.multi_reduction <maximumf>, %89, %cst_53 [2] : vector<2x8x8xf32> to vector<2x8xf32>
    %91 = vector.shape_cast %90 : vector<2x8xf32> to vector<2x8x1xf32>
    %92 = vector.broadcast %91 : vector<2x8x1xf32> to vector<2x8x8xf32>
    %93 = arith.subf %89, %92 : vector<2x8x8xf32>
    %94 = math.exp %93 : vector<2x8x8xf32>
    %cst_54 = arith.constant dense<0.000000e+00> : vector<2x8xf32>
    %95 = vector.multi_reduction <add>, %94, %cst_54 [2] : vector<2x8x8xf32> to vector<2x8xf32>
    %96 = vector.shape_cast %95 : vector<2x8xf32> to vector<2x8x1xf32>
    %97 = math.log %96 : vector<2x8x1xf32>
    %98 = arith.addf %91, %97 : vector<2x8x1xf32>
    %cst_55 = arith.constant -1.000000e-01 : f32
    %99 = vector.broadcast %cst_55 : f32 to vector<2x8x1xf32>
    %100 = arith.mulf %99, %98 : vector<2x8x1xf32>
    %cst_56 = arith.constant 1.000000e+01 : f32
    %101 = vector.broadcast %cst_56 : f32 to vector<2x8x1xf32>
    %102 = arith.mulf %83, %101 : vector<2x8x1xf32>
    %cst_57 = arith.constant 2.07944155 : f32
    %103 = vector.broadcast %cst_57 : f32 to vector<2x8x1xf32>
    %104 = arith.subf %102, %103 : vector<2x8x1xf32>
    %105 = vector.broadcast %104 : vector<2x8x1xf32> to vector<2x8x8xf32>
    %106 = arith.subf %105, %82 : vector<2x8x8xf32>
    %cst_58 = arith.constant dense<0xFF800000> : vector<2x8xf32>
    %107 = vector.multi_reduction <maximumf>, %106, %cst_58 [1] : vector<2x8x8xf32> to vector<2x8xf32>
    %108 = vector.shape_cast %107 : vector<2x8xf32> to vector<2x1x8xf32>
    %109 = vector.broadcast %108 : vector<2x1x8xf32> to vector<2x8x8xf32>
    %110 = arith.subf %106, %109 : vector<2x8x8xf32>
    %111 = math.exp %110 : vector<2x8x8xf32>
    %cst_59 = arith.constant dense<0.000000e+00> : vector<2x8xf32>
    %112 = vector.multi_reduction <add>, %111, %cst_59 [1] : vector<2x8x8xf32> to vector<2x8xf32>
    %113 = vector.shape_cast %112 : vector<2x8xf32> to vector<2x1x8xf32>
    %114 = math.log %113 : vector<2x1x8xf32>
    %115 = arith.addf %108, %114 : vector<2x1x8xf32>
    %cst_60 = arith.constant -1.000000e-01 : f32
    %116 = vector.broadcast %cst_60 : f32 to vector<2x1x8xf32>
    %117 = arith.mulf %116, %115 : vector<2x1x8xf32>
    %118 = vector.broadcast %100 : vector<2x8x1xf32> to vector<2x8x8xf32>
    %119 = vector.broadcast %117 : vector<2x1x8xf32> to vector<2x8x8xf32>
    %120 = arith.addf %118, %119 : vector<2x8x8xf32>
    %cst_61 = arith.constant 1.000000e+01 : f32
    %121 = vector.broadcast %cst_61 : f32 to vector<2x8x8xf32>
    %122 = arith.mulf %120, %121 : vector<2x8x8xf32>
    %123 = arith.subf %122, %82 : vector<2x8x8xf32>
    %cst_62 = arith.constant dense<0xFF800000> : vector<2x8xf32>
    %124 = vector.multi_reduction <maximumf>, %123, %cst_62 [1] : vector<2x8x8xf32> to vector<2x8xf32>
    %125 = vector.shape_cast %124 : vector<2x8xf32> to vector<2x1x8xf32>
    %126 = vector.broadcast %125 : vector<2x1x8xf32> to vector<2x8x8xf32>
    %127 = arith.subf %123, %126 : vector<2x8x8xf32>
    %128 = math.exp %127 : vector<2x8x8xf32>
    %cst_63 = arith.constant dense<0.000000e+00> : vector<2x8xf32>
    %129 = vector.multi_reduction <add>, %128, %cst_63 [1] : vector<2x8x8xf32> to vector<2x8xf32>
    %130 = vector.shape_cast %129 : vector<2x8xf32> to vector<2x1x8xf32>
    %131 = math.log %130 : vector<2x1x8xf32>
    %132 = arith.addf %125, %131 : vector<2x1x8xf32>
    %133 = vector.broadcast %132 : vector<2x1x8xf32> to vector<2x8x8xf32>
    %134 = arith.subf %123, %133 : vector<2x8x8xf32>
    %cst_64 = arith.constant 2.07944155 : f32
    %135 = vector.broadcast %cst_64 : f32 to vector<2x8x8xf32>
    %136 = arith.addf %134, %135 : vector<2x8x8xf32>
    %137 = vector.broadcast %41 : vector<2x1x8xf32> to vector<2x8x8xf32>
    %138 = arith.addf %136, %137 : vector<2x8x8xf32>
    %139 = math.exp %138 : vector<2x8x8xf32>
    %140 = vector.extract_strided_slice %139 {offsets = [0, 0, 0], sizes = [1, 8, 8], strides = [1, 1, 1]} : vector<2x8x8xf32> to vector<1x8x8xf32>
    %141 = vector.shape_cast %140 : vector<1x8x8xf32> to vector<8x8xf32>
    %c0_65 = arith.constant 0 : index
    %c0_66 = arith.constant 0 : index
    %c0_67 = arith.constant 0 : index
    %142 = vector.load %arg3[%c0_65, %c0_66, %c0_67] : memref<2x8x4xf32, #tpu.memory_space<vmem>>, vector<1x8x4xf32>
    %143 = vector.shape_cast %142 : vector<1x8x4xf32> to vector<8x4xf32>
    %cst_68 = arith.constant dense<0.000000e+00> : vector<8x4xf32>
    %144 = tpu.matmul %141, %143, %cst_68 {dimension_numbers = #tpu.dot_dimension_numbers<[1], [0], [0], [1], [0, 0, 1, 1], [], []>} : vector<8x8xf32>, vector<8x4xf32>, vector<8x4xf32> -> vector<8x4xf32>
    %c0_69 = arith.constant 0 : index
    %c0_70 = arith.constant 0 : index
    %c0_71 = arith.constant 0 : index
    %145 = vector.load %arg4[%c0_69, %c0_70, %c0_71] : memref<2x8x4xf32, #tpu.memory_space<vmem>>, vector<1x8x4xf32>
    %146 = vector.shape_cast %145 : vector<1x8x4xf32> to vector<8x4xf32>
    %147 = vector.shape_cast %144 : vector<8x4xf32> to vector<1x8x4xf32>
    tpu.vector_store %arg4[%c0_69, %c0_70, %c0_71], %147 {strides = array<i32>} : memref<2x8x4xf32, #tpu.memory_space<vmem>>, vector<1x8x4xf32>,
    %148 = vector.extract_strided_slice %139 {offsets = [1, 0, 0], sizes = [1, 8, 8], strides = [1, 1, 1]} : vector<2x8x8xf32> to vector<1x8x8xf32>
    %149 = vector.shape_cast %148 : vector<1x8x8xf32> to vector<8x8xf32>
    %c1_72 = arith.constant 1 : index
    %c0_73 = arith.constant 0 : index
    %c0_74 = arith.constant 0 : index
    %150 = vector.load %arg3[%c1_72, %c0_73, %c0_74] : memref<2x8x4xf32, #tpu.memory_space<vmem>>, vector<1x8x4xf32>
    %151 = vector.shape_cast %150 : vector<1x8x4xf32> to vector<8x4xf32>
    %cst_75 = arith.constant dense<0.000000e+00> : vector<8x4xf32>
    %152 = tpu.matmul %149, %151, %cst_75 {dimension_numbers = #tpu.dot_dimension_numbers<[1], [0], [0], [1], [0, 0, 1, 1], [], []>} : vector<8x8xf32>, vector<8x4xf32>, vector<8x4xf32> -> vector<8x4xf32>
    %c1_76 = arith.constant 1 : index
    %c0_77 = arith.constant 0 : index
    %c0_78 = arith.constant 0 : index
    %153 = vector.load %arg4[%c1_76, %c0_77, %c0_78] : memref<2x8x4xf32, #tpu.memory_space<vmem>>, vector<1x8x4xf32>
    %154 = vector.shape_cast %153 : vector<1x8x4xf32> to vector<8x4xf32>
    %155 = vector.shape_cast %152 : vector<8x4xf32> to vector<1x8x4xf32>
    tpu.vector_store %arg4[%c1_76, %c0_77, %c0_78], %155 {strides = array<i32>} : memref<2x8x4xf32, #tpu.memory_space<vmem>>, vector<1x8x4xf32>,
    return
  }
}

</mosaic_0001>

<llo_original>
// kernel: resampler_ot.1
$region0: #{resampler_ot.1}
  #allocation0 [shape = 'u32[]', space=smem, size = 0x4, offset = 0x4, fixed_abs, tag = 'smem constant byte address 0x4 - core index']
  #allocation1 [shape = 'u32[144,128]{1,0:T(1,128)}', space=vmem, size = 0x12000, scoped, tag = 'internal scratch']
  #allocation2 [shape = 'f32[2,8,8]{2,1,0:T(8,128)}', space=vmem, size = 0x2000, scoped, tag = 'scratch operand']
  #allocation3 [shape = 'f32[2,8,1]{2,1,0:T(8,128)}', space=vmem, size = 0x2000, scoped, tag = 'scratch operand']
  #allocation4 [shape = 'f32[2,1,8]{2,1,0:T(1,128)}', space=vmem, size = 0x400, scoped, tag = 'scratch operand']
  #allocation5 [shape = 'f32[2,1,1]{2,1,0:T(1,128)}', space=vmem, size = 0x400, scoped, tag = 'scratch operand']
  %s0 = inlined_call_operand.vmem [shape: f32[2,8,4], index: 0, kind: input, shape index: {}]
  %s1 = inlined_call_operand.vmem [shape: f32[2,1,8], index: 1, kind: input, shape index: {}]
  %s2 = inlined_call_operand.vmem [shape: f32[2,1,1], index: 2, kind: input, shape index: {}]
  %s3 = inlined_call_operand.vmem [shape: f32[2,8,4], index: 3, kind: input, shape index: {}]
  %s4 = inlined_call_operand.vmem [shape: f32[2,8,4], index: 4, kind: output, shape index: {}]
  %s5 = sld [smem:[#allocation0]]
  $region33: #{resampler_ot.1} parent=0
    _
  %s7 = ssub.s32 1, %s5
  %s8 = scalar_select 0, %s7, %s5
  // Predicated region
  $region2: #{resampler_ot.1} parent=0 // pred_check
    _
  $region3: #{resampler_ot.1} parent=0 // pred_check_branch
    %10 = sbr.rel (0) target = $region5
  $region4: #{resampler_ot.1} parent=0 // pred_region
    _
  $region5: #{resampler_ot.1} parent=0 // pred_fallthru
    _
  // Predicated region
  $region6: #{resampler_ot.1} parent=0 // pred_check
    _
  $region7: #{resampler_ot.1} parent=0 // pred_check_branch
    %12 = sbr.rel (0) target = $region9
  $region8: #{resampler_ot.1} parent=0 // pred_region
    _
  $region9: #{resampler_ot.1} parent=0 // pred_fallthru
    _
  // Predicated region
  $region10: #{resampler_ot.1} parent=0 // pred_check
    _
  $region11: #{resampler_ot.1} parent=0 // pred_check_branch
    %14 = sbr.rel (0) target = $region13
  $region12: #{resampler_ot.1} parent=0 // pred_region
    _
  $region13: #{resampler_ot.1} parent=0 // pred_fallthru
    _
  // Predicated region
  $region14: #{resampler_ot.1} parent=0 // pred_check
    _
  $region15: #{resampler_ot.1} parent=0 // pred_check_branch
    %16 = sbr.rel (0) target = $region17
  $region16: #{resampler_ot.1} parent=0 // pred_region
    _
  $region17: #{resampler_ot.1} parent=0 // pred_fallthru
    _
  %v17 = vld [vmem:[%s0] sm:$0xff]
  %v18 = vmul.f32 %v17, %v17
  %vm19 = vcmask 31744
  %v20 = vsel %vm19, %v18, 0.0
  %21 = vadd.xlane.f32.xlu0 %v20
  %v22 = vpop.xlane.xlu0 %21
  %v24 = vsel %vm19, %v17, 0
  %26 = vmatprep.subr.mxu0 0.0
  %27 = vmatpush1.xpose.msra.mxu0 0.0
  %28 = vmatprep.subr.mxu0 0.0
  %29 = vmatpush1.xpose.msra.mxu0 0.0
  %30 = vmatprep.subr.mxu0 0.0
  %31 = vmatpush1.xpose.msra.mxu0 0.0
  %32 = vmatprep.subr.mxu0 0.0
  %33 = vmatpush1.xpose.msra.mxu0 0.0
  %34 = vmatprep.subr.mxu0 0.0
  %35 = vmatpush1.xpose.msra.mxu0 0.0
  %36 = vmatprep.subr.mxu0 0.0
  %37 = vmatpush1.xpose.msra.mxu0 0.0
  %38 = vmatprep.subr.mxu0 0.0
  %39 = vmatpush1.xpose.msra.mxu0 0.0
  %40 = vmatprep.subr.mxu0 0.0
  %41 = vmatpush1.xpose.msra.mxu0 0.0
  %42 = vmatprep.subr.mxu0 0.0
  %43 = vmatpush1.xpose.msra.mxu0 0.0
  %44 = vmatprep.subr.mxu0 0.0
  %45 = vmatpush1.xpose.msra.mxu0 0.0
  %46 = vmatprep.subr.mxu0 0.0
  %47 = vmatpush1.xpose.msra.mxu0 0.0
  %48 = vmatprep.subr.mxu0 0.0
  %49 = vmatpush1.xpose.msra.mxu0 0.0
  %50 = vmatprep.subr.mxu0 0.0
  %51 = vmatpush1.xpose.msra.mxu0 0.0
  %52 = vmatprep.subr.mxu0 0.0
  %53 = vmatpush1.xpose.msra.mxu0 0.0
  %54 = vmatprep.subr.mxu0 0.0
  %55 = vmatpush1.xpose.msra.mxu0 0.0
  %56 = vmatprep.subr.mxu0 0.0
  %57 = vmatpush1.xpose.msra.mxu0 %v24
  %58 = vmatprep.subr.mxu0 0.0
  %59 = vmatpush2.xpose.msra.mxu0 0.0
  %60 = vmatprep.subr.mxu0 0.0
  %61 = vmatpush2.xpose.msra.mxu0 0.0
  %62 = vmatprep.subr.mxu0 0.0
  %63 = vmatpush2.xpose.msra.mxu0 0.0
  %64 = vmatprep.subr.mxu0 0.0
  %65 = vmatpush2.xpose.msra.mxu0 0.0
  %66 = vmatprep.subr.mxu0 0.0
  %67 = vmatpush2.xpose.msra.mxu0 0.0
  %68 = vmatprep.subr.mxu0 0.0
  %69 = vmatpush2.xpose.msra.mxu0 0.0
  %70 = vmatprep.subr.mxu0 0.0
  %71 = vmatpush2.xpose.msra.mxu0 0.0
  %72 = vmatprep.subr.mxu0 0.0
  %73 = vmatpush2.xpose.msra.mxu0 0.0
  %74 = vmatprep.subr.mxu0 0.0
  %75 = vmatpush2.xpose.msra.mxu0 0.0
  %76 = vmatprep.subr.mxu0 0.0
  %77 = vmatpush2.xpose.msra.mxu0 0.0
  %78 = vmatprep.subr.mxu0 0.0
  %79 = vmatpush2.xpose.msra.mxu0 0.0
  %80 = vmatprep.subr.mxu0 0.0
  %81 = vmatpush2.xpose.msra.mxu0 0.0
  %82 = vmatprep.subr.mxu0 0.0
  %83 = vmatpush2.xpose.msra.mxu0 0.0
  %84 = vmatprep.subr.mxu0 0.0
  %85 = vmatpush2.xpose.msra.mxu0 0.0
  %86 = vmatprep.subr.mxu0 0.0
  %87 = vmatpush2.xpose.msra.mxu0 0.0
  %88 = vmatprep.subr.mxu0 0.0
  %89 = vmatpush2.xpose.msra.mxu0 0.0
  %90 = vmatprep.mubr.f32.mxu0 0.0
  %91 = vmatmul.mubr.f32.gmra.mxu0 %v24
  %v92 = vpop.f32.mrf.mxu0
  %v93 = vadd.f32 0.0, %v92
  %v94 = vpop.f32.mrf.mxu0
  %95 = vdwg.mxu0
  %96 = vxpose.xlu0.b32.start [1/16] %v22, 128
  %97 = vxpose.xlu0.b32.cont [2/16] 0.0, 128
  %98 = vxpose.xlu0.b32.cont [3/16] 0.0, 128
  %99 = vxpose.xlu0.b32.cont [4/16] 0.0, 128
  %100 = vxpose.xlu0.b32.cont [5/16] 0.0, 128
  %101 = vxpose.xlu0.b32.cont [6/16] 0.0, 128
  %102 = vxpose.xlu0.b32.cont [7/16] 0.0, 128
  %103 = vxpose.xlu0.b32.cont [8/16] 0.0, 128
  %104 = vxpose.xlu0.b32.cont [9/16] 0.0, 128
  %105 = vxpose.xlu0.b32.cont [10/16] 0.0, 128
  %106 = vxpose.xlu0.b32.cont [11/16] 0.0, 128
  %107 = vxpose.xlu0.b32.cont [12/16] 0.0, 128
  %108 = vxpose.xlu0.b32.cont [13/16] 0.0, 128
  %109 = vxpose.xlu0.b32.cont [14/16] 0.0, 128
  %110 = vxpose.xlu0.b32.cont [15/16] 0.0, 128
  %111 = vxpose.xlu0.b32.end [16/16] 0.0, 128
  %v112 = vpop.trf.xlu0
  %v113 = vpop.trf.xlu0
  %v114 = vpop.trf.xlu0
  %v115 = vpop.trf.xlu0
  %v116 = vpop.trf.xlu0
  %v117 = vpop.trf.xlu0
  %v118 = vpop.trf.xlu0
  %v119 = vpop.trf.xlu0
  %v120 = vpop.trf.xlu0
  %v121 = vpop.trf.xlu0
  %v122 = vpop.trf.xlu0
  %v123 = vpop.trf.xlu0
  %v124 = vpop.trf.xlu0
  %v125 = vpop.trf.xlu0
  %v126 = vpop.trf.xlu0
  %v127 = vpop.trf.xlu0
  %v128 = vlaneseq
  %v129 = vshrl.u32 %v128, 7
  %v130 = vsub.s32 0, %v129
  %v131 = vrot.slane %v112, %v130
  %v132 = vadd.f32 %v22, %v131
  %v133 = vmul.f32 %v93, 2.0
  %v134 = vsub.f32 %v132, %v133
  %v135 = vmax.f32 %v134, 0.0
  %v136 = vmul.f32 %v135, 0.5
  %vm137 = vcmask 64512
  %138 = vst.msk [vmem:[#allocation2] sm:$0xff] %vm137, %v136
  %s139 = scalar_lea.vmem %s0, 8
  %v140 = vld [vmem:[%s139] sm:$0xff]
  %v141 = vmul.f32 %v140, %v140
  %v142 = vsel %vm19, %v141, 0.0
  %143 = vadd.xlane.f32.xlu0 %v142
  %v144 = vpop.xlane.xlu0 %143
  %v146 = vsel %vm19, %v140, 0
  %148 = vmatprep.subr.mxu0 0.0
  %149 = vmatpush1.xpose.msra.mxu0 0.0
  %150 = vmatprep.subr.mxu0 0.0
  %151 = vmatpush1.xpose.msra.mxu0 0.0
  %152 = vmatprep.subr.mxu0 0.0
  %153 = vmatpush1.xpose.msra.mxu0 0.0
  %154 = vmatprep.subr.mxu0 0.0
  %155 = vmatpush1.xpose.msra.mxu0 0.0
  %156 = vmatprep.subr.mxu0 0.0
  %157 = vmatpush1.xpose.msra.mxu0 0.0
  %158 = vmatprep.subr.mxu0 0.0
  %159 = vmatpush1.xpose.msra.mxu0 0.0
  %160 = vmatprep.subr.mxu0 0.0
  %161 = vmatpush1.xpose.msra.mxu0 0.0
  %162 = vmatprep.subr.mxu0 0.0
  %163 = vmatpush1.xpose.msra.mxu0 0.0
  %164 = vmatprep.subr.mxu0 0.0
  %165 = vmatpush1.xpose.msra.mxu0 0.0
  %166 = vmatprep.subr.mxu0 0.0
  %167 = vmatpush1.xpose.msra.mxu0 0.0
  %168 = vmatprep.subr.mxu0 0.0
  %169 = vmatpush1.xpose.msra.mxu0 0.0
  %170 = vmatprep.subr.mxu0 0.0
  %171 = vmatpush1.xpose.msra.mxu0 0.0
  %172 = vmatprep.subr.mxu0 0.0
  %173 = vmatpush1.xpose.msra.mxu0 0.0
  %174 = vmatprep.subr.mxu0 0.0
  %175 = vmatpush1.xpose.msra.mxu0 0.0
  %176 = vmatprep.subr.mxu0 0.0
  %177 = vmatpush1.xpose.msra.mxu0 0.0
  %178 = vmatprep.subr.mxu0 0.0
  %179 = vmatpush1.xpose.msra.mxu0 %v146
  %180 = vmatprep.subr.mxu0 0.0
  %181 = vmatpush2.xpose.msra.mxu0 0.0
  %182 = vmatprep.subr.mxu0 0.0
  %183 = vmatpush2.xpose.msra.mxu0 0.0
  %184 = vmatprep.subr.mxu0 0.0
  %185 = vmatpush2.xpose.msra.mxu0 0.0
  %186 = vmatprep.subr.mxu0 0.0
  %187 = vmatpush2.xpose.msra.mxu0 0.0
  %188 = vmatprep.subr.mxu0 0.0
  %189 = vmatpush2.xpose.msra.mxu0 0.0
  %190 = vmatprep.subr.mxu0 0.0
  %191 = vmatpush2.xpose.msra.mxu0 0.0
  %192 = vmatprep.subr.mxu0 0.0
  %193 = vmatpush2.xpose.msra.mxu0 0.0
  %194 = vmatprep.subr.mxu0 0.0
  %195 = vmatpush2.xpose.msra.mxu0 0.0
  %196 = vmatprep.subr.mxu0 0.0
  %197 = vmatpush2.xpose.msra.mxu0 0.0
  %198 = vmatprep.subr.mxu0 0.0
  %199 = vmatpush2.xpose.msra.mxu0 0.0
  %200 = vmatprep.subr.mxu0 0.0
  %201 = vmatpush2.xpose.msra.mxu0 0.0
  %202 = vmatprep.subr.mxu0 0.0
  %203 = vmatpush2.xpose.msra.mxu0 0.0
  %204 = vmatprep.subr.mxu0 0.0
  %205 = vmatpush2.xpose.msra.mxu0 0.0
  %206 = vmatprep.subr.mxu0 0.0
  %207 = vmatpush2.xpose.msra.mxu0 0.0
  %208 = vmatprep.subr.mxu0 0.0
  %209 = vmatpush2.xpose.msra.mxu0 0.0
  %210 = vmatprep.subr.mxu0 0.0
  %211 = vmatpush2.xpose.msra.mxu0 0.0
  %212 = vmatprep.mubr.f32.mxu0 0.0
  %213 = vmatmul.mubr.f32.gmra.mxu0 %v146
  %v214 = vpop.f32.mrf.mxu0
  %v215 = vadd.f32 0.0, %v214
  %v216 = vpop.f32.mrf.mxu0
  %217 = vdwg.mxu0
  %218 = vxpose.xlu0.b32.start [1/16] %v144, 128
  %219 = vxpose.xlu0.b32.cont [2/16] 0.0, 128
  %220 = vxpose.xlu0.b32.cont [3/16] 0.0, 128
  %221 = vxpose.xlu0.b32.cont [4/16] 0.0, 128
  %222 = vxpose.xlu0.b32.cont [5/16] 0.0, 128
  %223 = vxpose.xlu0.b32.cont [6/16] 0.0, 128
  %224 = vxpose.xlu0.b32.cont [7/16] 0.0, 128
  %225 = vxpose.xlu0.b32.cont [8/16] 0.0, 128
  %226 = vxpose.xlu0.b32.cont [9/16] 0.0, 128
  %227 = vxpose.xlu0.b32.cont [10/16] 0.0, 128
  %228 = vxpose.xlu0.b32.cont [11/16] 0.0, 128
  %229 = vxpose.xlu0.b32.cont [12/16] 0.0, 128
  %230 = vxpose.xlu0.b32.cont [13/16] 0.0, 128
  %231 = vxpose.xlu0.b32.cont [14/16] 0.0, 128
  %232 = vxpose.xlu0.b32.cont [15/16] 0.0, 128
  %233 = vxpose.xlu0.b32.end [16/16] 0.0, 128
  %v234 = vpop.trf.xlu0
  %v235 = vpop.trf.xlu0
  %v236 = vpop.trf.xlu0
  %v237 = vpop.trf.xlu0
  %v238 = vpop.trf.xlu0
  %v239 = vpop.trf.xlu0
  %v240 = vpop.trf.xlu0
  %v241 = vpop.trf.xlu0
  %v242 = vpop.trf.xlu0
  %v243 = vpop.trf.xlu0
  %v244 = vpop.trf.xlu0
  %v245 = vpop.trf.xlu0
  %v246 = vpop.trf.xlu0
  %v247 = vpop.trf.xlu0
  %v248 = vpop.trf.xlu0
  %v249 = vpop.trf.xlu0
  %v250 = vlaneseq
  %v251 = vshrl.u32 %v250, 7
  %v252 = vsub.s32 0, %v251
  %v253 = vrot.slane %v234, %v252
  %v254 = vadd.f32 %v144, %v253
  %v255 = vmul.f32 %v215, 2.0
  %v256 = vsub.f32 %v254, %v255
  %v257 = vmax.f32 %v256, 0.0
  %v258 = vmul.f32 %v257, 0.5
  %s259 = scalar_lea.vmem [#allocation2], 8
  %260 = vst.msk [vmem:[%s259] sm:$0xff] %vm137, %v258
  %v261 = vld [vmem:[#allocation2] sm:$0xff]
  %v262 = vld [vmem:[#allocation2 + $0x8] sm:$0xff]
  %v263 = vld [vmem:[%s1] sm:$0x1]
  %v264 = vld [vmem:[%s1 + $0x1] sm:$0x1]
  %v265 = vld [vmem:[%s2] sm:$0x1]
  %v266 = vld [vmem:[%s2 + $0x1] sm:$0x1]
  %v267 = vrcp.pop %v265
  %v268 = vmul.f32 1.0, %v267
  %v269 = vrcp.pop %v266
  %v270 = vmul.f32 1.0, %v269
  %v273 = vlaneseq
  %v274 = vshrl.u32 %v273, 7
  %v275 = vsub.s32 0, %v274
  %v276 = vrot.slane %v268, %v275
  %v277 = vlaneseq
  %v278 = vshrl.u32 %v277, 7
  %v279 = vsub.s32 0, %v278
  %v280 = vrot.slane %v270, %v279
  %281 = vset.pattern.permute.xlu0 0
  %282 = vperm.xlu0 %281, %v276
  %v283 = vpop.permute.xlu0 %282
  %285 = vset.pattern.permute.xlu0 0
  %286 = vperm.xlu0 %285, %v280
  %v287 = vpop.permute.xlu0 %286
  %v289 = vmul.f32 %v261, %v283
  %v290 = vmul.f32 %v262, %v287
  %v293 = vlaneseq
  %v294 = vshrl.u32 %v293, 7
  %v295 = vsub.s32 0, %v294
  %v296 = vrot.slane %v263, %v295
  %v297 = vlaneseq
  %v298 = vshrl.u32 %v297, 7
  %v299 = vsub.s32 0, %v298
  %v300 = vrot.slane %v264, %v299
  %v303 = vsub.f32 %v296, %v289
  %v304 = vsub.f32 %v300, %v290
  %v305 = vsel %vm137, %v303, -inf
  %306 = vmax.xlane.f32.xlu0 %v305
  %v307 = vpop.xlane.xlu0 %306
  %v308 = vsel %vm137, %v304, -inf
  %309 = vmax.xlane.f32.xlu0 %v308
  %v310 = vpop.xlane.xlu0 %309
  %v311 = vsub.f32 %v303, %v307
  %v312 = vsub.f32 %v304, %v310
  %v313 = vmul.f32 %v311, 1.442695
  %v314 = vpow.pop %v313
  %v315 = vmul.f32 %v312, 1.442695
  %v316 = vpow.pop %v315
  %v317 = vsel %vm137, %v314, 0.0
  %318 = vadd.xlane.f32.xlu0 %v317
  %v319 = vpop.xlane.xlu0 %318
  %v320 = vsel %vm137, %v316, 0.0
  %321 = vadd.xlane.f32.xlu0 %v320
  %v322 = vpop.xlane.xlu0 %321
  %v323 = vlog2.pop %v319
  %v324 = vmul.f32 %v323, 0.6931472
  %v325 = vlog2.pop %v322
  %v326 = vmul.f32 %v325, 0.6931472
  %v327 = vadd.f32 %v307, %v324
  %v328 = vadd.f32 %v310, %v326
  %v329 = vsub.f32 0.0, %v265
  %v330 = vsub.f32 0.0, %v266
  %v333 = vlaneseq
  %v334 = vshrl.u32 %v333, 7
  %v335 = vsub.s32 0, %v334
  %v336 = vrot.slane %v329, %v335
  %v337 = vlaneseq
  %v338 = vshrl.u32 %v337, 7
  %v339 = vsub.s32 0, %v338
  %v340 = vrot.slane %v330, %v339
  %v343 = vmul.f32 %v336, %v327
  %v344 = vmul.f32 %v340, %v328
  %vm345 = vcmask 7168
  %346 = vst.msk [vmem:[#allocation3] sm:$0xff] %vm345, %v343
  %347 = vst.msk [vmem:[#allocation3 + $0x8] sm:$0xff] %vm345, %v344
  %v348 = vsub.f32 -2.0794415, %v289
  %v349 = vsub.f32 -2.0794415, %v290
  %v350 = vsel %vm137, %v348, -inf
  %v351 = vrot.slane %v350, 4
  %v352 = vmax.f32 %v350, %v351
  %v353 = vrot.slane %v352, 2
  %v354 = vmax.f32 %v352, %v353
  %v355 = vrot.slane %v354, 1
  %v356 = vmax.f32 %v354, %v355
  %v357 = vsel %vm137, %v349, -inf
  %v358 = vrot.slane %v357, 4
  %v359 = vmax.f32 %v357, %v358
  %v360 = vrot.slane %v359, 2
  %v361 = vmax.f32 %v359, %v360
  %v362 = vrot.slane %v361, 1
  %v363 = vmax.f32 %v361, %v362
  %v364 = vsub.f32 %v348, %v356
  %v365 = vsub.f32 %v349, %v363
  %v366 = vmul.f32 %v364, 1.442695
  %v367 = vpow.pop %v366
  %v368 = vmul.f32 %v365, 1.442695
  %v369 = vpow.pop %v368
  %v370 = vsel %vm137, %v367, 0.0
  %v371 = vrot.slane %v370, 4
  %v372 = vadd.f32 %v370, %v371
  %v373 = vrot.slane %v372, 2
  %v374 = vadd.f32 %v372, %v373
  %v375 = vrot.slane %v374, 1
  %v376 = vadd.f32 %v374, %v375
  %v377 = vsel %vm137, %v369, 0.0
  %v378 = vrot.slane %v377, 4
  %v379 = vadd.f32 %v377, %v378
  %v380 = vrot.slane %v379, 2
  %v381 = vadd.f32 %v379, %v380
  %v382 = vrot.slane %v381, 1
  %v383 = vadd.f32 %v381, %v382
  %v384 = vlog2.pop %v376
  %v385 = vmul.f32 %v384, 0.6931472
  %v386 = vlog2.pop %v383
  %v387 = vmul.f32 %v386, 0.6931472
  %v388 = vadd.f32 %v356, %v385
  %v389 = vadd.f32 %v363, %v387
  %390 = vset.pattern.permute.xlu0 0
  %391 = vperm.xlu0 %390, %v329
  %v392 = vpop.permute.xlu0 %391
  %v394 = vlaneseq
  %v395 = vshrl.u32 %v394, 7
  %v396 = vsub.s32 0, %v395
  %v397 = vrot.slane %v392, %v396
  %398 = vset.pattern.permute.xlu0 0
  %399 = vperm.xlu0 %398, %v330
  %v400 = vpop.permute.xlu0 %399
  %v402 = vlaneseq
  %v403 = vshrl.u32 %v402, 7
  %v404 = vsub.s32 0, %v403
  %v405 = vrot.slane %v400, %v404
  %v406 = vmul.f32 %v397, %v388
  %v407 = vmul.f32 %v405, %v389
  %vm408 = vcmask 57344
  %409 = vst.msk [vmem:[#allocation4] sm:$0x1] %vm408, %v406
  %410 = vst.msk [vmem:[#allocation4 + $0x1] sm:$0x1] %vm408, %v407
  %vm411 = vcmask 0
  %412 = vst.msk [vmem:[#allocation5] sm:$0x1] %vm411, %v265
  %413 = vst.msk [vmem:[#allocation5 + $0x1] sm:$0x1] %vm411, %v266
  // While loop
  $region18: #{resampler_ot.1} parent=0 // loop_pre_header
    _
  $region19: #{resampler_ot.1} parent=0 // loop_header
    %s415 = sphi 0, %s672
    %p416 = scmp.lt.s32.totalorder %s415, 99
    %p417 = pneg %p416
  $region20: #{resampler_ot.1} parent=0 // loop_header_branch
    %419 = sbr.rel (%p417) target = $region24
  $region21: #{resampler_ot.1} parent=0 // loop_body
    %v420 = vld [vmem:[#allocation5] sm:$0x1]
    %v421 = vld [vmem:[#allocation5 + $0x1] sm:$0x1]
    %v422 = vrcp.pop %v420
    %v423 = vmul.f32 1.0, %v422
    %v424 = vrcp.pop %v421
    %v425 = vmul.f32 1.0, %v424
    %v428 = vlaneseq
    %v429 = vshrl.u32 %v428, 7
    %v430 = vsub.s32 0, %v429
    %v431 = vrot.slane %v423, %v430
    %v432 = vlaneseq
    %v433 = vshrl.u32 %v432, 7
    %v434 = vsub.s32 0, %v433
    %v435 = vrot.slane %v425, %v434
    %436 = vset.pattern.permute.xlu0 0
    %437 = vperm.xlu0 %436, %v431
    %v438 = vpop.permute.xlu0 %437
    %440 = vset.pattern.permute.xlu0 0
    %441 = vperm.xlu0 %440, %v435
    %v442 = vpop.permute.xlu0 %441
    %v444 = vmul.f32 %v261, %v438
    %v445 = vmul.f32 %v262, %v442
    %v446 = vld [vmem:[#allocation3] sm:$0xff]
    %v447 = vld [vmem:[#allocation3 + $0x8] sm:$0xff]
    %v448 = vld [vmem:[#allocation4] sm:$0x1]
    %v449 = vld [vmem:[#allocation4 + $0x1] sm:$0x1]
    %450 = vset.pattern.permute.xlu0 0
    %451 = vperm.xlu0 %450, %v423
    %v452 = vpop.permute.xlu0 %451
    %v454 = vlaneseq
    %v455 = vshrl.u32 %v454, 7
    %v456 = vsub.s32 0, %v455
    %v457 = vrot.slane %v452, %v456
    %458 = vset.pattern.permute.xlu0 0
    %459 = vperm.xlu0 %458, %v425
    %v460 = vpop.permute.xlu0 %459
    %v462 = vlaneseq
    %v463 = vshrl.u32 %v462, 7
    %v464 = vsub.s32 0, %v463
    %v465 = vrot.slane %v460, %v464
    %v466 = vmul.f32 %v448, %v457
    %v467 = vmul.f32 %v449, %v465
    %v468 = vadd.f32 %v263, %v466
    %v469 = vadd.f32 %v264, %v467
    %v472 = vlaneseq
    %v473 = vshrl.u32 %v472, 7
    %v474 = vsub.s32 0, %v473
    %v475 = vrot.slane %v468, %v474
    %v476 = vlaneseq
    %v477 = vshrl.u32 %v476, 7
    %v478 = vsub.s32 0, %v477
    %v479 = vrot.slane %v469, %v478
    %v482 = vsub.f32 %v475, %v444
    %v483 = vsub.f32 %v479, %v445
    %v484 = vsel %vm137, %v482, -inf
    %485 = vmax.xlane.f32.xlu0 %v484
    %v486 = vpop.xlane.xlu0 %485
    %v487 = vsel %vm137, %v483, -inf
    %488 = vmax.xlane.f32.xlu0 %v487
    %v489 = vpop.xlane.xlu0 %488
    %v490 = vsub.f32 %v482, %v486
    %v491 = vsub.f32 %v483, %v489
    %v492 = vmul.f32 %v490, 1.442695
    %v493 = vpow.pop %v492
    %v494 = vmul.f32 %v491, 1.442695
    %v495 = vpow.pop %v494
    %v496 = vsel %vm137, %v493, 0.0
    %497 = vadd.xlane.f32.xlu0 %v496
    %v498 = vpop.xlane.xlu0 %497
    %v499 = vsel %vm137, %v495, 0.0
    %500 = vadd.xlane.f32.xlu0 %v499
    %v501 = vpop.xlane.xlu0 %500
    %v502 = vlog2.pop %v498
    %v503 = vmul.f32 %v502, 0.6931472
    %v504 = vlog2.pop %v501
    %v505 = vmul.f32 %v504, 0.6931472
    %v506 = vadd.f32 %v486, %v503
    %v507 = vadd.f32 %v489, %v505
    %v508 = vsub.f32 0.0, %v420
    %v509 = vsub.f32 0.0, %v421
    %v512 = vlaneseq
    %v513 = vshrl.u32 %v512, 7
    %v514 = vsub.s32 0, %v513
    %v515 = vrot.slane %v508, %v514
    %v516 = vlaneseq
    %v517 = vshrl.u32 %v516, 7
    %v518 = vsub.s32 0, %v517
    %v519 = vrot.slane %v509, %v518
    %v522 = vmul.f32 %v515, %v506
    %v523 = vmul.f32 %v519, %v507
    %v526 = vmul.f32 %v446, %v431
    %v527 = vmul.f32 %v447, %v435
    %v528 = vsub.f32 %v526, 2.0794415
    %v529 = vsub.f32 %v527, 2.0794415
    %531 = vset.pattern.permute.xlu0 0
    %532 = vperm.xlu0 %531, %v528
    %v533 = vpop.permute.xlu0 %532
    %536 = vset.pattern.permute.xlu0 0
    %537 = vperm.xlu0 %536, %v529
    %v538 = vpop.permute.xlu0 %537
    %v540 = vsub.f32 %v533, %v444
    %v541 = vsub.f32 %v538, %v445
    %v542 = vsel %vm137, %v540, -inf
    %v543 = vrot.slane %v542, 4
    %v544 = vmax.f32 %v542, %v543
    %v545 = vrot.slane %v544, 2
    %v546 = vmax.f32 %v544, %v545
    %v547 = vrot.slane %v546, 1
    %v548 = vmax.f32 %v546, %v547
    %v549 = vsel %vm137, %v541, -inf
    %v550 = vrot.slane %v549, 4
    %v551 = vmax.f32 %v549, %v550
    %v552 = vrot.slane %v551, 2
    %v553 = vmax.f32 %v551, %v552
    %v554 = vrot.slane %v553, 1
    %v555 = vmax.f32 %v553, %v554
    %v556 = vsub.f32 %v540, %v548
    %v557 = vsub.f32 %v541, %v555
    %v558 = vmul.f32 %v556, 1.442695
    %v559 = vpow.pop %v558
    %v560 = vmul.f32 %v557, 1.442695
    %v561 = vpow.pop %v560
    %v562 = vsel %vm137, %v559, 0.0
    %v563 = vrot.slane %v562, 4
    %v564 = vadd.f32 %v562, %v563
    %v565 = vrot.slane %v564, 2
    %v566 = vadd.f32 %v564, %v565
    %v567 = vrot.slane %v566, 1
    %v568 = vadd.f32 %v566, %v567
    %v569 = vsel %vm137, %v561, 0.0
    %v570 = vrot.slane %v569, 4
    %v571 = vadd.f32 %v569, %v570
    %v572 = vrot.slane %v571, 2
    %v573 = vadd.f32 %v571, %v572
    %v574 = vrot.slane %v573, 1
    %v575 = vadd.f32 %v573, %v574
    %v576 = vlog2.pop %v568
    %v577 = vmul.f32 %v576, 0.6931472
    %v578 = vlog2.pop %v575
    %v579 = vmul.f32 %v578, 0.6931472
    %v580 = vadd.f32 %v548, %v577
    %v581 = vadd.f32 %v555, %v579
    %582 = vset.pattern.permute.xlu0 0
    %583 = vperm.xlu0 %582, %v508
    %v584 = vpop.permute.xlu0 %583
    %v586 = vlaneseq
    %v587 = vshrl.u32 %v586, 7
    %v588 = vsub.s32 0, %v587
    %v589 = vrot.slane %v584, %v588
    %590 = vset.pattern.permute.xlu0 0
    %591 = vperm.xlu0 %590, %v509
    %v592 = vpop.permute.xlu0 %591
    %v594 = vlaneseq
    %v595 = vshrl.u32 %v594, 7
    %v596 = vsub.s32 0, %v595
    %v597 = vrot.slane %v592, %v596
    %v598 = vmul.f32 %v589, %v580
    %v599 = vmul.f32 %v597, %v581
    %v600 = vadd.f32 %v446, %v522
    %v601 = vadd.f32 %v447, %v523
    %v602 = vmul.f32 %v600, 0.5
    %v603 = vmul.f32 %v601, 0.5
    %v604 = vadd.f32 %v448, %v598
    %v605 = vadd.f32 %v449, %v599
    %v606 = vmul.f32 %v604, 0.5
    %v607 = vmul.f32 %v605, 0.5
    %608 = vst.msk [vmem:[#allocation3] sm:$0xff] %vm345, %v602
    %609 = vst.msk [vmem:[#allocation3 + $0x8] sm:$0xff] %vm345, %v603
    %610 = vst.msk [vmem:[#allocation4] sm:$0x1] %vm408, %v606
    %611 = vst.msk [vmem:[#allocation4 + $0x1] sm:$0x1] %vm408, %v607
    %v612 = vsub.f32 %v602, %v446
    %v613 = vsub.f32 %v603, %v447
    %v614 = vand.u32 2147483647, %v612
    %v615 = vand.u32 2147483647, %v613
    %v616 = vsel %vm345, %v614, -inf
    %v617 = vrot.slane %v616, 4
    %v618 = vmax.f32 %v616, %v617
    %v619 = vrot.slane %v618, 2
    %v620 = vmax.f32 %v618, %v619
    %v621 = vrot.slane %v620, 1
    %v622 = vmax.f32 %v620, %v621
    %v623 = vsel %vm345, %v615, -inf
    %v624 = vrot.slane %v623, 4
    %v625 = vmax.f32 %v623, %v624
    %v626 = vrot.slane %v625, 2
    %v627 = vmax.f32 %v625, %v626
    %v628 = vrot.slane %v627, 1
    %v629 = vmax.f32 %v627, %v628
    %v630 = vsub.f32 %v606, %v448
    %v631 = vsub.f32 %v607, %v449
    %v632 = vand.u32 2147483647, %v630
    %v633 = vand.u32 2147483647, %v631
    %v634 = vsel %vm408, %v632, -inf
    %635 = vmax.xlane.f32.xlu0 %v634
    %v636 = vpop.xlane.xlu0 %635
    %v637 = vsel %vm408, %v633, -inf
    %638 = vmax.xlane.f32.xlu0 %v637
    %v639 = vpop.xlane.xlu0 %638
    %vm640 = vcmp.gt.f32.partialorder %v622, 0.001
    %vm641 = vcmp.gt.f32.partialorder %v629, 0.001
    %vm642 = vcmp.gt.f32.partialorder %v636, 0.001
    %vm643 = vcmp.gt.f32.partialorder %v639, 0.001
    %vm644 = vmor %vm640, %vm642
    %vm645 = vmor %vm641, %vm643
    %v646 = vmul.f32 %v420, 0.5625
    %v647 = vmul.f32 %v421, 0.5625
    %v648 = vmax.f32 %v646, 0.1
    %v649 = vmax.f32 %v647, 0.1
    %vm650 = vcmp.lt.f32.partialorder %v648, %v420
    %vm651 = vcmp.lt.f32.partialorder %v649, %v421
    %vm652 = vmor %vm650, %vm644
    %vm653 = vmor %vm651, %vm645
    %654 = vst.msk [vmem:[#allocation5] sm:$0x1] %vm411, %v648
    %655 = vst.msk [vmem:[#allocation5 + $0x1] sm:$0x1] %vm411, %v649
    %v656 = vsel %vm652, 1.0, 0.0
    %v657 = vsel %vm653, 1.0, 0.0
    %v658 = vsel %vm411, %v656, inf
    %v659 = vsel %vm411, %v657, inf
    %v660 = vmin.f32 %v658, %v659
    %661 = vmin.xlane.f32.xlu0 %v660
    %v662 = vpop.xlane.xlu0 %661
    %v663 = vrot.slane %v662, 4
    %v664 = vmin.f32 %v662, %v663
    %v665 = vrot.slane %v664, 2
    %v666 = vmin.f32 %v664, %v665
    %v667 = vrot.slane %v666, 1
    %v668 = vmin.f32 %v666, %v667
    %s669 = vtos %v668
    %p670 = scmp.gt.f32.partialorder %s669, 0.5
    %s671 = sadd.s32 %s415, 1
    %s672 = scalar_select %p670, %s671, 100
  $region22: #{resampler_ot.1} parent=0 // loop_footer
    _
  $region23: #{resampler_ot.1} parent=0 // loop_footer_branch
    %414 = sbr.rel target = $region19
  $region24: #{resampler_ot.1} parent=0 // loop_exit
    _
  %v673 = vmul.f32 %v261, 10.0
  %v674 = vmul.f32 %v262, 10.0
  %v675 = vld [vmem:[#allocation3] sm:$0xff]
  %v676 = vld [vmem:[#allocation3 + $0x8] sm:$0xff]
  %v677 = vld [vmem:[#allocation4] sm:$0x1]
  %v678 = vld [vmem:[#allocation4 + $0x1] sm:$0x1]
  %v679 = vmul.f32 %v677, 10.0
  %v680 = vmul.f32 %v678, 10.0
  %v681 = vadd.f32 %v263, %v679
  %v682 = vadd.f32 %v264, %v680
  %v685 = vlaneseq
  %v686 = vshrl.u32 %v685, 7
  %v687 = vsub.s32 0, %v686
  %v688 = vrot.slane %v681, %v687
  %v689 = vlaneseq
  %v690 = vshrl.u32 %v689, 7
  %v691 = vsub.s32 0, %v690
  %v692 = vrot.slane %v682, %v691
  %v695 = vsub.f32 %v688, %v673
  %v696 = vsub.f32 %v692, %v674
  %v697 = vsel %vm137, %v695, -inf
  %698 = vmax.xlane.f32.xlu0 %v697
  %v699 = vpop.xlane.xlu0 %698
  %v700 = vsel %vm137, %v696, -inf
  %701 = vmax.xlane.f32.xlu0 %v700
  %v702 = vpop.xlane.xlu0 %701
  %v703 = vsub.f32 %v695, %v699
  %v704 = vsub.f32 %v696, %v702
  %v705 = vmul.f32 %v703, 1.442695
  %v706 = vpow.pop %v705
  %v707 = vmul.f32 %v704, 1.442695
  %v708 = vpow.pop %v707
  %v709 = vsel %vm137, %v706, 0.0
  %710 = vadd.xlane.f32.xlu0 %v709
  %v711 = vpop.xlane.xlu0 %710
  %v712 = vsel %vm137, %v708, 0.0
  %713 = vadd.xlane.f32.xlu0 %v712
  %v714 = vpop.xlane.xlu0 %713
  %v715 = vlog2.pop %v711
  %v716 = vmul.f32 %v715, 0.6931472
  %v717 = vlog2.pop %v714
  %v718 = vmul.f32 %v717, 0.6931472
  %v719 = vadd.f32 %v699, %v716
  %v720 = vadd.f32 %v702, %v718
  %v721 = vmul.f32 %v719, -0.1
  %v722 = vmul.f32 %v720, -0.1
  %v723 = vmul.f32 %v675, 10.0
  %v724 = vmul.f32 %v676, 10.0
  %v725 = vsub.f32 %v723, 2.0794415
  %v726 = vsub.f32 %v724, 2.0794415
  %728 = vset.pattern.permute.xlu0 0
  %729 = vperm.xlu0 %728, %v725
  %v730 = vpop.permute.xlu0 %729
  %733 = vset.pattern.permute.xlu0 0
  %734 = vperm.xlu0 %733, %v726
  %v735 = vpop.permute.xlu0 %734
  %v737 = vsub.f32 %v730, %v673
  %v738 = vsub.f32 %v735, %v674
  %v739 = vsel %vm137, %v737, -inf
  %v740 = vrot.slane %v739, 4
  %v741 = vmax.f32 %v739, %v740
  %v742 = vrot.slane %v741, 2
  %v743 = vmax.f32 %v741, %v742
  %v744 = vrot.slane %v743, 1
  %v745 = vmax.f32 %v743, %v744
  %v746 = vsel %vm137, %v738, -inf
  %v747 = vrot.slane %v746, 4
  %v748 = vmax.f32 %v746, %v747
  %v749 = vrot.slane %v748, 2
  %v750 = vmax.f32 %v748, %v749
  %v751 = vrot.slane %v750, 1
  %v752 = vmax.f32 %v750, %v751
  %v753 = vsub.f32 %v737, %v745
  %v754 = vsub.f32 %v738, %v752
  %v755 = vmul.f32 %v753, 1.442695
  %v756 = vpow.pop %v755
  %v757 = vmul.f32 %v754, 1.442695
  %v758 = vpow.pop %v757
  %v759 = vsel %vm137, %v756, 0.0
  %v760 = vrot.slane %v759, 4
  %v761 = vadd.f32 %v759, %v760
  %v762 = vrot.slane %v761, 2
  %v763 = vadd.f32 %v761, %v762
  %v764 = vrot.slane %v763, 1
  %v765 = vadd.f32 %v763, %v764
  %v766 = vsel %vm137, %v758, 0.0
  %v767 = vrot.slane %v766, 4
  %v768 = vadd.f32 %v766, %v767
  %v769 = vrot.slane %v768, 2
  %v770 = vadd.f32 %v768, %v769
  %v771 = vrot.slane %v770, 1
  %v772 = vadd.f32 %v770, %v771
  %v773 = vlog2.pop %v765
  %v774 = vmul.f32 %v773, 0.6931472
  %v775 = vlog2.pop %v772
  %v776 = vmul.f32 %v775, 0.6931472
  %v777 = vadd.f32 %v745, %v774
  %v778 = vadd.f32 %v752, %v776
  %v779 = vmul.f32 %v777, -0.1
  %v780 = vmul.f32 %v778, -0.1
  %v781 = vadd.f32 %v721, %v779
  %v782 = vadd.f32 %v722, %v780
  %v783 = vmul.f32 %v781, 10.0
  %v784 = vmul.f32 %v782, 10.0
  %v785 = vsub.f32 %v783, %v673
  %v786 = vsub.f32 %v784, %v674
  %v787 = vsel %vm137, %v785, -inf
  %v788 = vrot.slane %v787, 4
  %v789 = vmax.f32 %v787, %v788
  %v790 = vrot.slane %v789, 2
  %v791 = vmax.f32 %v789, %v790
  %v792 = vrot.slane %v791, 1
  %v793 = vmax.f32 %v791, %v792
  %v794 = vsel %vm137, %v786, -inf
  %v795 = vrot.slane %v794, 4
  %v796 = vmax.f32 %v794, %v795
  %v797 = vrot.slane %v796, 2
  %v798 = vmax.f32 %v796, %v797
  %v799 = vrot.slane %v798, 1
  %v800 = vmax.f32 %v798, %v799
  %v801 = vsub.f32 %v785, %v793
  %v802 = vsub.f32 %v786, %v800
  %v803 = vmul.f32 %v801, 1.442695
  %v804 = vpow.pop %v803
  %v805 = vmul.f32 %v802, 1.442695
  %v806 = vpow.pop %v805
  %v807 = vsel %vm137, %v804, 0.0
  %v808 = vrot.slane %v807, 4
  %v809 = vadd.f32 %v807, %v808
  %v810 = vrot.slane %v809, 2
  %v811 = vadd.f32 %v809, %v810
  %v812 = vrot.slane %v811, 1
  %v813 = vadd.f32 %v811, %v812
  %v814 = vsel %vm137, %v806, 0.0
  %v815 = vrot.slane %v814, 4
  %v816 = vadd.f32 %v814, %v815
  %v817 = vrot.slane %v816, 2
  %v818 = vadd.f32 %v816, %v817
  %v819 = vrot.slane %v818, 1
  %v820 = vadd.f32 %v818, %v819
  %v821 = vlog2.pop %v813
  %v822 = vmul.f32 %v821, 0.6931472
  %v823 = vlog2.pop %v820
  %v824 = vmul.f32 %v823, 0.6931472
  %v825 = vadd.f32 %v793, %v822
  %v826 = vadd.f32 %v800, %v824
  %v827 = vsub.f32 %v785, %v825
  %v828 = vsub.f32 %v786, %v826
  %v829 = vadd.f32 %v827, 2.0794415
  %v830 = vadd.f32 %v828, 2.0794415
  %v831 = vadd.f32 %v829, %v296
  %v832 = vadd.f32 %v830, %v300
  %v833 = vmul.f32 %v831, 1.442695
  %v834 = vpow.pop %v833
  %v835 = vmul.f32 %v832, 1.442695
  %v836 = vpow.pop %v835
  %v837 = vld [vmem:[%s3] sm:$0xff]
  %v839 = vsel %vm137, %v834, 0
  %841 = vmatprep.subr.mxu0 0.0
  %842 = vmatpush1.msra.mxu0 0.0
  %843 = vmatprep.subr.mxu0 0.0
  %844 = vmatpush1.msra.mxu0 0.0
  %845 = vmatprep.subr.mxu0 0.0
  %846 = vmatpush1.msra.mxu0 0.0
  %847 = vmatprep.subr.mxu0 0.0
  %848 = vmatpush1.msra.mxu0 0.0
  %849 = vmatprep.subr.mxu0 0.0
  %850 = vmatpush1.msra.mxu0 0.0
  %851 = vmatprep.subr.mxu0 0.0
  %852 = vmatpush1.msra.mxu0 0.0
  %853 = vmatprep.subr.mxu0 0.0
  %854 = vmatpush1.msra.mxu0 0.0
  %855 = vmatprep.subr.mxu0 0.0
  %856 = vmatpush1.msra.mxu0 0.0
  %857 = vmatprep.subr.mxu0 0.0
  %858 = vmatpush1.msra.mxu0 0.0
  %859 = vmatprep.subr.mxu0 0.0
  %860 = vmatpush1.msra.mxu0 0.0
  %861 = vmatprep.subr.mxu0 0.0
  %862 = vmatpush1.msra.mxu0 0.0
  %863 = vmatprep.subr.mxu0 0.0
  %864 = vmatpush1.msra.mxu0 0.0
  %865 = vmatprep.subr.mxu0 0.0
  %866 = vmatpush1.msra.mxu0 0.0
  %867 = vmatprep.subr.mxu0 0.0
  %868 = vmatpush1.msra.mxu0 0.0
  %869 = vmatprep.subr.mxu0 0.0
  %870 = vmatpush1.msra.mxu0 0.0
  %871 = vmatprep.subr.mxu0 0.0
  %872 = vmatpush1.msra.mxu0 %v837
  %873 = vmatprep.subr.mxu0 0.0
  %874 = vmatpush2.msra.mxu0 0.0
  %875 = vmatprep.subr.mxu0 0.0
  %876 = vmatpush2.msra.mxu0 0.0
  %877 = vmatprep.subr.mxu0 0.0
  %878 = vmatpush2.msra.mxu0 0.0
  %879 = vmatprep.subr.mxu0 0.0
  %880 = vmatpush2.msra.mxu0 0.0
  %881 = vmatprep.subr.mxu0 0.0
  %882 = vmatpush2.msra.mxu0 0.0
  %883 = vmatprep.subr.mxu0 0.0
  %884 = vmatpush2.msra.mxu0 0.0
  %885 = vmatprep.subr.mxu0 0.0
  %886 = vmatpush2.msra.mxu0 0.0
  %887 = vmatprep.subr.mxu0 0.0
  %888 = vmatpush2.msra.mxu0 0.0
  %889 = vmatprep.subr.mxu0 0.0
  %890 = vmatpush2.msra.mxu0 0.0
  %891 = vmatprep.subr.mxu0 0.0
  %892 = vmatpush2.msra.mxu0 0.0
  %893 = vmatprep.subr.mxu0 0.0
  %894 = vmatpush2.msra.mxu0 0.0
  %895 = vmatprep.subr.mxu0 0.0
  %896 = vmatpush2.msra.mxu0 0.0
  %897 = vmatprep.subr.mxu0 0.0
  %898 = vmatpush2.msra.mxu0 0.0
  %899 = vmatprep.subr.mxu0 0.0
  %900 = vmatpush2.msra.mxu0 0.0
  %901 = vmatprep.subr.mxu0 0.0
  %902 = vmatpush2.msra.mxu0 0.0
  %903 = vmatprep.subr.mxu0 0.0
  %904 = vmatpush2.msra.mxu0 0.0
  %905 = vmatprep.mubr.f32.mxu0 0.0
  %906 = vmatmul.mubr.f32.gmra.mxu0 %v839
  %v907 = vpop.f32.mrf.mxu0
  %v908 = vadd.f32 0.0, %v907
  %v909 = vpop.f32.mrf.mxu0
  %910 = vdwg.mxu0
  %911 = vst.msk [vmem:[%s4] sm:$0xff] %vm19, %v908
  %s912 = scalar_lea.vmem %s3, 8
  %v913 = vld [vmem:[%s912] sm:$0xff]
  %v915 = vsel %vm137, %v836, 0
  %917 = vmatprep.subr.mxu0 0.0
  %918 = vmatpush1.msra.mxu0 0.0
  %919 = vmatprep.subr.mxu0 0.0
  %920 = vmatpush1.msra.mxu0 0.0
  %921 = vmatprep.subr.mxu0 0.0
  %922 = vmatpush1.msra.mxu0 0.0
  %923 = vmatprep.subr.mxu0 0.0
  %924 = vmatpush1.msra.mxu0 0.0
  %925 = vmatprep.subr.mxu0 0.0
  %926 = vmatpush1.msra.mxu0 0.0
  %927 = vmatprep.subr.mxu0 0.0
  %928 = vmatpush1.msra.mxu0 0.0
  %929 = vmatprep.subr.mxu0 0.0
  %930 = vmatpush1.msra.mxu0 0.0
  %931 = vmatprep.subr.mxu0 0.0
  %932 = vmatpush1.msra.mxu0 0.0
  %933 = vmatprep.subr.mxu0 0.0
  %934 = vmatpush1.msra.mxu0 0.0
  %935 = vmatprep.subr.mxu0 0.0
  %936 = vmatpush1.msra.mxu0 0.0
  %937 = vmatprep.subr.mxu0 0.0
  %938 = vmatpush1.msra.mxu0 0.0
  %939 = vmatprep.subr.mxu0 0.0
  %940 = vmatpush1.msra.mxu0 0.0
  %941 = vmatprep.subr.mxu0 0.0
  %942 = vmatpush1.msra.mxu0 0.0
  %943 = vmatprep.subr.mxu0 0.0
  %944 = vmatpush1.msra.mxu0 0.0
  %945 = vmatprep.subr.mxu0 0.0
  %946 = vmatpush1.msra.mxu0 0.0
  %947 = vmatprep.subr.mxu0 0.0
  %948 = vmatpush1.msra.mxu0 %v913
  %949 = vmatprep.subr.mxu0 0.0
  %950 = vmatpush2.msra.mxu0 0.0
  %951 = vmatprep.subr.mxu0 0.0
  %952 = vmatpush2.msra.mxu0 0.0
  %953 = vmatprep.subr.mxu0 0.0
  %954 = vmatpush2.msra.mxu0 0.0
  %955 = vmatprep.subr.mxu0 0.0
  %956 = vmatpush2.msra.mxu0 0.0
  %957 = vmatprep.subr.mxu0 0.0
  %958 = vmatpush2.msra.mxu0 0.0
  %959 = vmatprep.subr.mxu0 0.0
  %960 = vmatpush2.msra.mxu0 0.0
  %961 = vmatprep.subr.mxu0 0.0
  %962 = vmatpush2.msra.mxu0 0.0
  %963 = vmatprep.subr.mxu0 0.0
  %964 = vmatpush2.msra.mxu0 0.0
  %965 = vmatprep.subr.mxu0 0.0
  %966 = vmatpush2.msra.mxu0 0.0
  %967 = vmatprep.subr.mxu0 0.0
  %968 = vmatpush2.msra.mxu0 0.0
  %969 = vmatprep.subr.mxu0 0.0
  %970 = vmatpush2.msra.mxu0 0.0
  %971 = vmatprep.subr.mxu0 0.0
  %972 = vmatpush2.msra.mxu0 0.0
  %973 = vmatprep.subr.mxu0 0.0
  %974 = vmatpush2.msra.mxu0 0.0
  %975 = vmatprep.subr.mxu0 0.0
  %976 = vmatpush2.msra.mxu0 0.0
  %977 = vmatprep.subr.mxu0 0.0
  %978 = vmatpush2.msra.mxu0 0.0
  %979 = vmatprep.subr.mxu0 0.0
  %980 = vmatpush2.msra.mxu0 0.0
  %981 = vmatprep.mubr.f32.mxu0 0.0
  %982 = vmatmul.mubr.f32.gmra.mxu0 %v915
  %v983 = vpop.f32.mrf.mxu0
  %v984 = vadd.f32 0.0, %v983
  %v985 = vpop.f32.mrf.mxu0
  %986 = vdwg.mxu0
  %s987 = scalar_lea.vmem %s4, 8
  %988 = vst.msk [vmem:[%s987] sm:$0xff] %vm19, %v984
  // Predicated region
  $region25: #{resampler_ot.1} parent=0 // pred_check
    _
  $region26: #{resampler_ot.1} parent=0 // pred_check_branch
    %990 = sbr.rel (0) target = $region28
  $region27: #{resampler_ot.1} parent=0 // pred_region
    _
  $region28: #{resampler_ot.1} parent=0 // pred_fallthru
    _
  // Predicated region
  $region29: #{resampler_ot.1} parent=0 // pred_check
    _
  $region30: #{resampler_ot.1} parent=0 // pred_check_branch
    %992 = sbr.rel (0) target = $region32
  $region31: #{resampler_ot.1} parent=0 // pred_region
    _
  $region32: #{resampler_ot.1} parent=0 // pred_fallthru
    _

</llo_original>
